<compile_context>
chip_gen: v5e
topology: v5e:2x2
jax: 0.10.0
libtpu: 0.0.40
codegen_flags: <defaults>
</compile_context>

<pallas_src>
import functools

import jax
import jax.numpy as jnp
from jax.experimental import pallas as pl
from jax.experimental.pallas import tpu as pltpu


def _layernorm_kernel(x_ref, a_ref, b_ref, o_ref, *, eps: float, features: int):
    x = x_ref[...].astype(jnp.float32)                  # (tile_rows, F)
    # torch.std defaults to unbiased (ddof=1); guard features == 1
    # (reference would produce NaN there; we emit y = b_2 instead).
    denom = features - 1 if features > 1 else 1
    mean = jnp.mean(x, axis=-1, keepdims=True)           # (tile, 1)
    diff = x - mean
    var = jnp.sum(diff * diff, axis=-1, keepdims=True) * (1.0 / denom)
    std = jnp.sqrt(var)
    # Narrow per-row reciprocal (tile,1) instead of dividing the full tile.
    inv = pl.reciprocal(std + eps, approx=False)          # exact: 1e-5 parity
    a = a_ref[...].astype(jnp.float32)                    # (1, F)
    b = b_ref[...].astype(jnp.float32)                    # (1, F)
    o_ref[...] = (diff * inv * a + b).astype(o_ref.dtype)


def _tpu_vmem_info():
    """Best-effort (per-TensorCore VMEM bytes, TensorCore count)."""
    kind = ""
    try:
        kind = jax.devices()[0].device_kind.lower()
    except Exception:
        pass
    is_v7 = "v7" in kind
    per_core_cap = (64 if is_v7 else 128) * 1024 * 1024   # v7x: 64 MiB / TC
    num_cores = 2 if is_v7 else 1
    cap = None
    try:
        info = pltpu.get_tpu_info()
        cap = getattr(info, "vmem_capacity_bytes", None)
    except Exception:
        cap = None
    if cap:
        # Clamp in case the query reports per-chip capacity on multi-TC parts.
        cap = min(int(cap), per_core_cap)
    else:
        cap = per_core_cap
    return cap, num_cores


def _even_grid_tile(rows: int, tile: int) -> int:
    """Shrink tile (8-aligned) so cdiv(rows, tile) is even when cheaply possible."""
    if pl.cdiv(rows, tile) % 2 == 0:
        return tile
    steps = pl.cdiv(rows, tile)
    for target in (steps + 1, steps + 3, steps + 5):
        cand = ((pl.cdiv(rows, target) + 7) // 8) * 8
        cand = max(8, min(cand, tile))
        if pl.cdiv(rows, cand) % 2 == 0:
            return cand
    return tile   # heuristic only; slight imbalance acceptable


def _choose_row_tile(rows: int, features: int, itemsize: int,
                     vmem_bytes: int, num_cores: int) -> int:
    """Bytes-based, 8-aligned row tile: as large as the VMEM budget allows."""
    if rows <= 8:
        return rows                                  # full-extent block: always legal
    budget = int(vmem_bytes * 0.5)                   # leave room for weights/internals
    # double-buffered input + output blocks (x dtype) + ~2 full-tile f32 temps.
    per_row = 4 * features * itemsize + 2 * features * 4
    tile = max(8, (budget // max(per_row, 1) // 8) * 8)
    max_tile = (rows // 8) * 8                       # largest 8-aligned tile <= rows
    tile = min(tile, max_tile)
    # Prefer >= 2 grid steps when there is enough work: DMA/compute overlap,
    # and on v7x keeps both TensorCores busy.
    if rows >= 16 and tile >= rows:
        tile = min(tile, max(8, ((pl.cdiv(rows, 2) + 7) // 8) * 8))
    if num_cores >= 2:
        tile = _even_grid_tile(rows, tile)
    return tile


def layer_norm(x, a_2, b_2, eps=1e-6, *, row_tile=None):
    """LayerNorm over the last dim of x (any leading dims)."""
    orig_shape = x.shape
    features = int(orig_shape[-1])
    rows = 1
    for d in orig_shape[:-1]:
        rows *= int(d)

    x2d = x.reshape(rows, features)
    a2d = a_2.reshape(1, features)
    b2d = b_2.reshape(1, features)

    vmem_cap, num_cores = _tpu_vmem_info()
    if row_tile is None:
        tile = _choose_row_tile(rows, features, jnp.dtype(x.dtype).itemsize,
                                vmem_cap, num_cores)
    else:
        tile = max(1, min(int(row_tile), rows))
        if tile > 8:
            tile = (tile // 8) * 8

    grid = (pl.cdiv(rows, tile),)
    # Derived from the (clamped) per-core capacity: ~44.8 MiB on v7x,
    # ~89.6 MiB on v5e/v6e.
    vmem_limit = min(int(vmem_cap * 0.7), 100 * 1024 * 1024)

    out = pl.pallas_call(
        functools.partial(_layernorm_kernel, eps=eps, features=features),
        out_shape=jax.ShapeDtypeStruct((rows, features), x.dtype),
        grid_spec=pltpu.PrefetchScalarGridSpec(
            num_scalar_prefetch=0,
            grid=grid,
            in_specs=[
                pl.BlockSpec((tile, features), lambda i: (i, 0)),
                pl.BlockSpec((1, features), lambda i: (0, 0)),
                pl.BlockSpec((1, features), lambda i: (0, 0)),
            ],
            out_specs=pl.BlockSpec((tile, features), lambda i: (i, 0)),
        ),
        compiler_params=pltpu.CompilerParams(
            dimension_semantics=("parallel",),
            vmem_limit_bytes=vmem_limit,
        ),
    )(x2d, a2d, b2d)

    return out.reshape(orig_shape)


if __name__ == "__main__":
    batch, seq, features = 2, 8, 32
    key = jax.random.PRNGKey(0)
    x = jax.random.normal(key, (batch, seq, features), dtype=jnp.float32)

    # Same init as nn.Parameter(torch.ones/zeros(features))
    a_2 = jnp.ones((features,), dtype=jnp.float32)
    b_2 = jnp.zeros((features,), dtype=jnp.float32)

    out = layer_norm(x, a_2, b_2, eps=1e-6)
    out = jax.block_until_ready(out)

    # Reference (pure JAX, mirrors the PyTorch forward: ddof=1 std, eps outside sqrt)
    mean = jnp.mean(x, axis=-1, keepdims=True)
    std = jnp.std(x, axis=-1, keepdims=True, ddof=1)
    ref = a_2 * (x - mean) / (std + 1e-6) + b_2
    assert jnp.allclose(out, ref, atol=1e-5, rtol=1e-5)

    print("KERNEL_OK")
</pallas_src>

<mosaic_0001>
module attributes {stable_mosaic.version = 11 : i64} {
  func.func @_layernorm_kernel(%arg0: i32, %arg1: memref<8x32xf32, #tpu.memory_space<vmem>>, %arg2: memref<1x32xf32, #tpu.memory_space<vmem>>, %arg3: memref<1x32xf32, #tpu.memory_space<vmem>>, %arg4: memref<8x32xf32, #tpu.memory_space<vmem>>) attributes {dimension_semantics = [#tpu.dimension_semantics<parallel>], iteration_bounds = array<i64: 2>, scalar_prefetch = 0 : i64, scratch_operands = 0 : i64, tpu.core_type = #tpu.core_type<tc>, window_params = [{transform_indices = @transform_0, window_bounds = array<i64: 8, 32>}, {pipeline_mode = #tpu.pipeline_mode<synchronous>, transform_indices = @transform_1, window_bounds = array<i64: 1, 32>}, {pipeline_mode = #tpu.pipeline_mode<synchronous>, transform_indices = @transform_2, window_bounds = array<i64: 1, 32>}, {transform_indices = @transform_3, window_bounds = array<i64: 8, 32>}]} {
    %c0 = arith.constant 0 : index
    %c0_0 = arith.constant 0 : index
    %0 = vector.load %arg1[%c0, %c0_0] : memref<8x32xf32, #tpu.memory_space<vmem>>, vector<8x32xf32>
    %cst = arith.constant dense<0.000000e+00> : vector<8xf32>
    %1 = vector.multi_reduction <add>, %0, %cst [1] : vector<8x32xf32> to vector<8xf32>
    %2 = vector.shape_cast %1 : vector<8xf32> to vector<8x1xf32>
    %cst_1 = arith.constant 3.200000e+01 : f32
    %3 = vector.broadcast %cst_1 : f32 to vector<8x1xf32>
    %4 = arith.divf %2, %3 : vector<8x1xf32>
    %5 = vector.broadcast %4 : vector<8x1xf32> to vector<8x32xf32>
    %6 = arith.subf %0, %5 : vector<8x32xf32>
    %7 = arith.mulf %6, %6 : vector<8x32xf32>
    %cst_2 = arith.constant dense<0.000000e+00> : vector<8xf32>
    %8 = vector.multi_reduction <add>, %7, %cst_2 [1] : vector<8x32xf32> to vector<8xf32>
    %9 = vector.shape_cast %8 : vector<8xf32> to vector<8x1xf32>
    %cst_3 = arith.constant 0.0322580636 : f32
    %10 = vector.broadcast %cst_3 : f32 to vector<8x1xf32>
    %11 = arith.mulf %9, %10 : vector<8x1xf32>
    %12 = math.sqrt %11 : vector<8x1xf32>
    %cst_4 = arith.constant 9.99999997E-7 : f32
    %13 = vector.broadcast %cst_4 : f32 to vector<8x1xf32>
    %14 = arith.addf %12, %13 : vector<8x1xf32>
    %15 = tpu.reciprocal %14 : vector<8x1xf32> -> vector<8x1xf32>
    %c0_5 = arith.constant 0 : index
    %c0_6 = arith.constant 0 : index
    %16 = vector.load %arg2[%c0_5, %c0_6] : memref<1x32xf32, #tpu.memory_space<vmem>>, vector<1x32xf32>
    %c0_7 = arith.constant 0 : index
    %c0_8 = arith.constant 0 : index
    %17 = vector.load %arg3[%c0_7, %c0_8] : memref<1x32xf32, #tpu.memory_space<vmem>>, vector<1x32xf32>
    %18 = vector.broadcast %15 : vector<8x1xf32> to vector<8x32xf32>
    %19 = arith.mulf %6, %18 : vector<8x32xf32>
    %20 = vector.broadcast %16 : vector<1x32xf32> to vector<8x32xf32>
    %21 = arith.mulf %19, %20 : vector<8x32xf32>
    %22 = vector.broadcast %17 : vector<1x32xf32> to vector<8x32xf32>
    %23 = arith.addf %21, %22 : vector<8x32xf32>
    %c0_9 = arith.constant 0 : index
    %c0_10 = arith.constant 0 : index
    %24 = vector.load %arg4[%c0_9, %c0_10] : memref<8x32xf32, #tpu.memory_space<vmem>>, vector<8x32xf32>
    tpu.vector_store %arg4[%c0_9, %c0_10], %23 {strides = array<i32>} : memref<8x32xf32, #tpu.memory_space<vmem>>, vector<8x32xf32>,
    return
  }
  func.func @transform_0(%arg0: i32) -> (i32, i32) {
    %c0_i32 = arith.constant 0 : i32
    %c0_i32_0 = arith.constant 0 : i32
    return %arg0, %c0_i32 : i32, i32
  }
  func.func @transform_1(%arg0: i32) -> (i32, i32) {
    %c0_i32 = arith.constant 0 : i32
    %c0_i32_0 = arith.constant 0 : i32
    %c0_i32_1 = arith.constant 0 : i32
    return %c0_i32, %c0_i32_0 : i32, i32
  }
  func.func @transform_2(%arg0: i32) -> (i32, i32) {
    %c0_i32 = arith.constant 0 : i32
    %c0_i32_0 = arith.constant 0 : i32
    %c0_i32_1 = arith.constant 0 : i32
    return %c0_i32, %c0_i32_0 : i32, i32
  }
  func.func @transform_3(%arg0: i32) -> (i32, i32) {
    %c0_i32 = arith.constant 0 : i32
    %c0_i32_0 = arith.constant 0 : i32
    return %arg0, %c0_i32 : i32, i32
  }
}

</mosaic_0001>

<llo_original>
// kernel: tpu_custom_call.1
$region0: #{tpu_custom_call.1}
  #allocation0 [shape = 'u32[]', space=smem, size = 0x4, offset = 0x4, fixed_abs, tag = 'smem constant byte address 0x4 - core index']
  #allocation1 [shape = 'u32[72,128]{1,0:T(1,128)}', space=vmem, size = 0x9000, scoped, tag = 'internal scratch']
  %s0 = inlined_call_operand.hbm [shape: f32[16,32], index: 0, kind: input, shape index: {}]
  %s1 = inlined_call_operand.hbm [shape: f32[1,32], index: 1, kind: input, shape index: {}]
  %s2 = inlined_call_operand.vmem [shape: f32[1,32], index: 2, kind: input, shape index: {}]
  %s3 = inlined_call_operand.hbm [shape: f32[16,32], index: 3, kind: output, shape index: {}]
  %s4 = sld [smem:[#allocation0]]
  $region53: #{tpu_custom_call.1} parent=0
    _
  %s6 = ssub.s32 1, %s4
  %s7 = scalar_select 0, %s6, %s4
  $region1: #{tpu_custom_call.1} parent=0
    #allocation2 [shape = 'u8[8192]{0}', space=vmem, size = 0x2000, scoped, tag = 'input window, operand 0']
    #allocation3 [shape = 's32[2]{0}', space=sflag, size = 0x8, scoped, tag = 'scoped memory for tpu_custom_call.1']
    #allocation4 [shape = 's32[2]{0}', space=sflag, size = 0x8, scoped, tag = 'scoped memory for tpu_custom_call.1']
    #allocation5 [shape = 'u8[512]{0}', space=vmem, size = 0x400, scoped, tag = 'input window, operand 1, single buffered']
    #allocation6 [shape = 's32[1]{0}', space=sflag, size = 0x4, scoped, tag = 'scoped memory for tpu_custom_call.1']
    #allocation7 [shape = 'u8[8192]{0}', space=vmem, size = 0x2000, scoped, tag = 'output window, operand 0']
    %8 = vsyncpa [#allocation3], 0
    %s9 = scalar_lea.sflag [#allocation3], 1
    %10 = vsyncpa %s9, 0
    %11 = vsyncpa [#allocation6], 0
    %12 = vsyncpa [#allocation4], 0
    %s13 = scalar_lea.sflag [#allocation4], 1
    %14 = vsyncpa %s13, 0
    loop: start=0, step=1, limit=4
    $region2: #{tpu_custom_call.1} parent=1 // loop_pre_header
      _
    $region3: #{tpu_custom_call.1} parent=1 // loop_header
      %s16 = sphi 0, %s20
      %p17 = scmp.ge.s32.totalorder %s16, 4
      %s26 = sphi 0, %s28
      %s29 = sphi 0, %s26
      %s30 = sphi 0, %s29
      %s46 = sphi 0, %s30
      %s50 = sphi 0, %s50
      %s52 = sphi 0, %s50
      %s53 = sphi 0, %s52
      %s67 = sphi 0, %s53
      %s71 = sphi 0, %s71
      %s73 = sphi 0, %s71
      %s74 = sphi 0, %s73
      %s88 = sphi 0, %s74
      %s94 = sphi 0, %s96
      %s97 = sphi 0, %s94
      %s98 = sphi 0, %s97
      %s114 = sphi 0, %s98
    $region4: #{tpu_custom_call.1} parent=1 // loop_header_branch
      %19 = sbr.rel (%p17) target = $region8
    $region5: #{tpu_custom_call.1} parent=1 // loop_body
      %s21 = ssub.s32 %s16, 1
      %s22 = ssub.s32 %s16, 2
      %s23 = sadd.s32 %s16, 1
      %s24 = ssub.s32 %s16, %s23
      %p25 = scmp.eq.s32.totalorder %s24, 0
      %s27 = sadd.s32 %s26, 1
      %s28 = scalar_select %p25, %s26, %s27
      %p31 = pneg %p25
      %p32 = scmp.eq.s32.totalorder %s16, 1
      %p33 = por %p31, %p32
      %p34 = scmp.ne.s32.totalorder %s26, %s29
      %p35 = scmp.eq.s32.totalorder %s16, 0
      %p36 = por %p34, %p35
      %p37 = scmp.ne.s32.totalorder %s26, %s29
      %p38 = scmp.eq.s32.totalorder %s21, 1
      %p39 = por %p37, %p38
      %p40 = scmp.ne.s32.totalorder %s29, %s30
      %p41 = scmp.eq.s32.totalorder %s21, 0
      %p42 = por %p40, %p41
      %p43 = scmp.ne.s32.totalorder %s29, %s30
      %p44 = scmp.eq.s32.totalorder %s22, 1
      %p45 = por %p43, %p44
      %p47 = scmp.ne.s32.totalorder %s30, %s46
      %p48 = scmp.eq.s32.totalorder %s22, 0
      %p49 = por %p47, %p48
      %s51 = sadd.s32 %s50, 1
      %p54 = scmp.eq.s32.totalorder %s16, 1
      %p55 = scmp.ne.s32.totalorder %s50, %s52
      %p56 = scmp.eq.s32.totalorder %s16, 0
      %p57 = por %p55, %p56
      %p58 = scmp.ne.s32.totalorder %s50, %s52
      %p59 = scmp.eq.s32.totalorder %s21, 1
      %p60 = por %p58, %p59
      %p61 = scmp.ne.s32.totalorder %s52, %s53
      %p62 = scmp.eq.s32.totalorder %s21, 0
      %p63 = por %p61, %p62
      %p64 = scmp.ne.s32.totalorder %s52, %s53
      %p65 = scmp.eq.s32.totalorder %s22, 1
      %p66 = por %p64, %p65
      %p68 = scmp.ne.s32.totalorder %s53, %s67
      %p69 = scmp.eq.s32.totalorder %s22, 0
      %p70 = por %p68, %p69
      %s72 = sadd.s32 %s71, 1
      %p75 = scmp.eq.s32.totalorder %s16, 1
      %p76 = scmp.ne.s32.totalorder %s71, %s73
      %p77 = scmp.eq.s32.totalorder %s16, 0
      %p78 = por %p76, %p77
      %p79 = scmp.ne.s32.totalorder %s71, %s73
      %p80 = scmp.eq.s32.totalorder %s21, 1
      %p81 = por %p79, %p80
      %p82 = scmp.ne.s32.totalorder %s73, %s74
      %p83 = scmp.eq.s32.totalorder %s21, 0
      %p84 = por %p82, %p83
      %p85 = scmp.ne.s32.totalorder %s73, %s74
      %p86 = scmp.eq.s32.totalorder %s22, 1
      %p87 = por %p85, %p86
      %p89 = scmp.ne.s32.totalorder %s74, %s88
      %p90 = scmp.eq.s32.totalorder %s22, 0
      %p91 = por %p89, %p90
      %s92 = ssub.s32 %s16, %s23
      %p93 = scmp.eq.s32.totalorder %s92, 0
      %s95 = sadd.s32 %s94, 1
      %s96 = scalar_select %p93, %s94, %s95
      %p99 = pneg %p93
      %p100 = scmp.eq.s32.totalorder %s16, 1
      %p101 = por %p99, %p100
      %p102 = scmp.ne.s32.totalorder %s94, %s97
      %p103 = scmp.eq.s32.totalorder %s16, 0
      %p104 = por %p102, %p103
      %p105 = scmp.ne.s32.totalorder %s94, %s97
      %p106 = scmp.eq.s32.totalorder %s21, 1
      %p107 = por %p105, %p106
      %p108 = scmp.ne.s32.totalorder %s97, %s98
      %p109 = scmp.eq.s32.totalorder %s21, 0
      %p110 = por %p108, %p109
      %p111 = scmp.ne.s32.totalorder %s97, %s98
      %p112 = scmp.eq.s32.totalorder %s22, 1
      %p113 = por %p111, %p112
      %p115 = scmp.ne.s32.totalorder %s98, %s114
      %p116 = scmp.eq.s32.totalorder %s22, 0
      %p117 = por %p115, %p116
      %p118 = scmp.le.s32.totalorder 1, %s16
      %p119 = scmp.lt.s32.totalorder %s16, 3
      %p120 = pnand %p118, %p119
      %p121 = pneg %p120
      // Predicated region
      $region9: #{tpu_custom_call.1} parent=5 // pred_check
        _
      $region10: #{tpu_custom_call.1} parent=5 // pred_check_branch
        %123 = sbr.rel (%p120) target = $region12
      $region11: #{tpu_custom_call.1} parent=5 // pred_region
        %s124 = ssub.s32 %s16, 1
        // Predicated region
        $region13: #{tpu_custom_call.1} parent=11 // pred_check
          %p125 = pneg %p63
        $region14: #{tpu_custom_call.1} parent=11 // pred_check_branch
          %127 = sbr.rel (%p125) target = $region16
        $region15: #{tpu_custom_call.1} parent=11 // pred_region
          %129 = vsyncadd [#allocation6], 0
          %s131 = sshll.u32 %s1, 4
          %s132 = int_to_ptr.hbm [resolvable:$true] %s131
          %s133 = sshll.u32 [#allocation5], 4
          %s134 = int_to_ptr.vmem [resolvable:$true] %s133
          %136 = dma.hbm_to_vmem [thread:$0]  %s132, 16, %s134, [#allocation6]
        $region16: #{tpu_custom_call.1} parent=11 // pred_fallthru
          _
        // Predicated region
        $region17: #{tpu_custom_call.1} parent=11 // pred_check
          %p137 = pneg %p84
        $region18: #{tpu_custom_call.1} parent=11 // pred_check_branch
          %139 = sbr.rel (%p137) target = $region20
        $region19: #{tpu_custom_call.1} parent=11 // pred_region
          _
        $region20: #{tpu_custom_call.1} parent=11 // pred_fallthru
          _
      $region12: #{tpu_custom_call.1} parent=5 // pred_fallthru
        _
      %p140 = scmp.lt.s32.totalorder %s16, 2
      // Predicated region
      $region21: #{tpu_custom_call.1} parent=5 // pred_check
        %p141 = pneg %p140
      $region22: #{tpu_custom_call.1} parent=5 // pred_check_branch
        %143 = sbr.rel (%p141) target = $region24
      $region23: #{tpu_custom_call.1} parent=5 // pred_region
        // Predicated region
        $region25: #{tpu_custom_call.1} parent=23 // pred_check
          %p144 = pneg %p36
        $region26: #{tpu_custom_call.1} parent=23 // pred_check_branch
          %146 = sbr.rel (%p144) target = $region28
        $region27: #{tpu_custom_call.1} parent=23 // pred_region
          %s147 = sand.u32 %s26, 1
          %s148 = scalar_lea.sflag [#allocation3], %s147
          %s149 = sand.u32 %s26, 1
          %s150 = smul.addr %s149, 8
          %s151 = scalar_lea.vmem [#allocation2], %s150
          %153 = vsyncadd %s148, 0
          %s154 = smul.addr %s16, 8
          %s155 = scalar_lea.hbm %s0, %s154
          %s157 = sshll.u32 %s155, 4
          %s158 = int_to_ptr.hbm [resolvable:$true] %s157
          %s159 = sshll.u32 %s151, 4
          %s160 = int_to_ptr.vmem [resolvable:$true] %s159
          %162 = dma.hbm_to_vmem [thread:$0]  %s158, 128, %s160, %s148
        $region28: #{tpu_custom_call.1} parent=23 // pred_fallthru
          _
      $region24: #{tpu_custom_call.1} parent=5 // pred_fallthru
        _
      %p163 = scmp.le.s32.totalorder 1, %s16
      %p164 = scmp.lt.s32.totalorder %s16, 3
      %p165 = pnand %p163, %p164
      %p166 = pneg %p165
      // Predicated region
      $region29: #{tpu_custom_call.1} parent=5 // pred_check
        _
      $region30: #{tpu_custom_call.1} parent=5 // pred_check_branch
        %168 = sbr.rel (%p165) target = $region32
      $region31: #{tpu_custom_call.1} parent=5 // pred_region
        %s169 = ssub.s32 %s16, 1
        %s170 = sand.u32 %s29, 1
        %s171 = scalar_lea.sflag [#allocation3], %s170
        %s172 = sand.u32 %s29, 1
        %s173 = smul.addr %s172, 8
        %s174 = scalar_lea.vmem [#allocation2], %s173
        // Predicated region
        $region33: #{tpu_custom_call.1} parent=31 // pred_check
          %p175 = pneg %p42
        $region34: #{tpu_custom_call.1} parent=31 // pred_check_branch
          %177 = sbr.rel (%p175) target = $region36
        $region35: #{tpu_custom_call.1} parent=31 // pred_region
          %179 = dma.done %s171, 128
        $region36: #{tpu_custom_call.1} parent=31 // pred_fallthru
          _
        // Predicated region
        $region37: #{tpu_custom_call.1} parent=31 // pred_check
          %p180 = pneg %p63
        $region38: #{tpu_custom_call.1} parent=31 // pred_check_branch
          %182 = sbr.rel (%p180) target = $region40
        $region39: #{tpu_custom_call.1} parent=31 // pred_region
          %184 = dma.done [#allocation6], 16
        $region40: #{tpu_custom_call.1} parent=31 // pred_fallthru
          _
        %s185 = sand.u32 %s29, 1
        %s186 = scalar_lea.sflag [#allocation3], %s185
        %s187 = sand.u32 %s29, 1
        %s188 = smul.addr %s187, 8
        %s189 = scalar_lea.vmem [#allocation2], %s188
        %p190 = pneg %p42
        %p191 = pneg %p39
        %p192 = pneg %p63
        %p193 = pneg %p60
        %p194 = pneg %p84
        %p195 = pneg %p81
        %p196 = pneg %p110
        %p197 = pneg %p107
        %s198 = sand.u32 %s97, 1
        %s199 = scalar_lea.sflag [#allocation4], %s198
        %s200 = sand.u32 %s97, 1
        %s201 = smul.addr %s200, 8
        %s202 = scalar_lea.vmem [#allocation7], %s201
        %v203 = vld [vmem:[%s174] sm:$0xff]
        %vm204 = vcmask 261120
        %v205 = vsel %vm204, %v203, 0.0
        %206 = vadd.xlane.f32.xlu0 %v205
        %v207 = vpop.xlane.xlu0 %206
        %v208 = vrcp.pop 32.0
        %v209 = vmul.f32 32.0, %v208
        %v210 = vsub.f32 1.0, %v209
        %v211 = vmul.f32 %v208, %v210
        %v212 = vadd.f32 %v208, %v211
        %vm213 = vweird.f32 %v208
        %v214 = vsel %vm213, %v208, %v212
        %v215 = vmul.f32 %v207, %v214
        %v216 = vsub.f32 %v203, %v215
        %v217 = vmul.f32 %v216, %v216
        %v218 = vsel %vm204, %v217, 0.0
        %219 = vadd.xlane.f32.xlu0 %v218
        %v220 = vpop.xlane.xlu0 %219
        %v221 = vmul.f32 %v220, 0.032258064
        %v222 = vrsqrt.pop %v221
        %v223 = vmul.f32 %v222, %v221
        %v224 = vmul.f32 %v223, %v222
        %v225 = vmul.f32 0.5, %v224
        %v226 = vsub.f32 1.5, %v225
        %v227 = vmul.f32 %v222, %v226
        %v228 = vmul.f32 %v221, %v227
        %vm229 = vcmp.eq.f32.partialorder %v221, inf
        %v230 = vsel %vm229, %v221, %v228
        %vm231 = vcmp.eq.f32.partialorder %v221, 0.0
        %v232 = vand.u32 %v221, 2147483648
        %v233 = vsel %vm231, %v232, %v230
        %v234 = vadd.f32 %v233, 1e-06
        %v235 = vrcp.pop %v234
        %v236 = vmul.f32 %v234, %v235
        %v237 = vsub.f32 1.0, %v236
        %v238 = vmul.f32 %v235, %v237
        %v239 = vadd.f32 %v235, %v238
        %vm240 = vweird.f32 %v234
        %vm241 = vweird.f32 %v235
        %vm242 = vmor %vm240, %vm241
        %v243 = vsel %vm242, %v235, %v239
        %v244 = vand.u32 2147483647, %v234
        %vm245 = vcmp.eq.f32.partialorder %v244, 8.507059e+37
        %v246 = vand.u32 %v234, 2147483648
        %v247 = vor.u32 1.1754944e-38, %v246
        %v248 = vsel %vm245, %v247, %v243
        %v249 = vld [vmem:[#allocation5] sm:$0x1]
        %v250 = vld [vmem:[%s2] sm:$0x1]
        %v251 = vmul.f32 %v216, %v248
        %v253 = vperm.slane %v249, 0
        %v255 = vmul.f32 %v251, %v253
        %v257 = vperm.slane %v250, 0
        %v259 = vadd.f32 %v255, %v257
        %260 = vst.msk [vmem:[%s202] sm:$0xff] %vm204, %v259
        %s261 = sand.u32 %s97, 1
        %s262 = scalar_lea.sflag [#allocation4], %s261
        %s263 = sand.u32 %s97, 1
        %s264 = smul.addr %s263, 8
        %s265 = scalar_lea.vmem [#allocation7], %s264
        // Predicated region
        $region41: #{tpu_custom_call.1} parent=31 // pred_check
          %p266 = pneg %p107
        $region42: #{tpu_custom_call.1} parent=31 // pred_check_branch
          %268 = sbr.rel (%p266) target = $region44
        $region43: #{tpu_custom_call.1} parent=31 // pred_region
          %270 = vsyncadd %s262, 0
          %s271 = smul.addr %s21, 8
          %s272 = scalar_lea.hbm %s3, %s271
          %s274 = sshll.u32 %s265, 4
          %s275 = int_to_ptr.vmem [resolvable:$true] %s274
          %s276 = sshll.u32 %s272, 4
          %s277 = int_to_ptr.hbm [resolvable:$true] %s276
          %279 = dma.vmem_to_hbm [thread:$0]  %s275, 128, %s277, %s262
        $region44: #{tpu_custom_call.1} parent=31 // pred_fallthru
          _
      $region32: #{tpu_custom_call.1} parent=5 // pred_fallthru
        _
      %p280 = scmp.le.s32.totalorder 2, %s16
      // Predicated region
      $region45: #{tpu_custom_call.1} parent=5 // pred_check
        %p281 = pneg %p280
      $region46: #{tpu_custom_call.1} parent=5 // pred_check_branch
        %283 = sbr.rel (%p281) target = $region48
      $region47: #{tpu_custom_call.1} parent=5 // pred_region
        %s284 = ssub.s32 %s16, 2
        // Predicated region
        $region49: #{tpu_custom_call.1} parent=47 // pred_check
          %p285 = pneg %p113
        $region50: #{tpu_custom_call.1} parent=47 // pred_check_branch
          %287 = sbr.rel (%p285) target = $region52
        $region51: #{tpu_custom_call.1} parent=47 // pred_region
          %s288 = sand.u32 %s98, 1
          %s289 = scalar_lea.sflag [#allocation4], %s288
          %s290 = sand.u32 %s98, 1
          %s291 = smul.addr %s290, 8
          %s292 = scalar_lea.vmem [#allocation7], %s291
          %294 = dma.done %s289, 128
        $region52: #{tpu_custom_call.1} parent=47 // pred_fallthru
          _
      $region48: #{tpu_custom_call.1} parent=5 // pred_fallthru
        _
    $region6: #{tpu_custom_call.1} parent=1 // loop_footer
      %s20 = sadd.s32 1, %s16
    $region7: #{tpu_custom_call.1} parent=1 // loop_footer_branch
      %15 = sbr.rel target = $region3
    $region8: #{tpu_custom_call.1} parent=1 // loop_exit
      _
    %295 = vsyncpa [#allocation3], 1
    %s296 = scalar_lea.sflag [#allocation3], 1
    %297 = vsyncpa %s296, 1
    %298 = vsyncpa [#allocation6], 1
    %299 = vsyncpa [#allocation4], 1
    %s300 = scalar_lea.sflag [#allocation4], 1
    %301 = vsyncpa %s300, 1

</llo_original>
